<compile_context>
chip_gen: v5e
topology: v5e:2x2
jax: 0.10.0
libtpu: 0.0.40
codegen_flags: <defaults>
</compile_context>

<pallas_src>
import functools

import jax
import jax.numpy as jnp
import numpy as np
from jax.experimental import pallas as pl
from jax.experimental.pallas import tpu as pltpu


def _round_up(x, m):
    return ((x + m - 1) // m) * m


def _actor_kernel(x_ref, eps_ref,
                  w1_ref, b1_ref, w2_ref, b2_ref,
                  wh_ref, bh_ref,
                  out_ref, *, max_action, action_dim):
    x = x_ref[...]
    eps = eps_ref[...]

    # l1 + ReLU
    h1 = jnp.dot(x, w1_ref[...], preferred_element_type=jnp.float32) + b1_ref[...]
    h1 = jnp.maximum(h1, 0.0)

    # l2 + ReLU
    h2 = jnp.dot(h1, w2_ref[...], preferred_element_type=jnp.float32) + b2_ref[...]
    h2 = jnp.maximum(h2, 0.0)

    # fused mean | log_std heads: one matmul, slice columns
    heads = jnp.dot(h2, wh_ref[...], preferred_element_type=jnp.float32) + bh_ref[...]
    mean = heads[:, :action_dim]
    log_std = jnp.clip(heads[:, action_dim:], -20.0, 2.0)
    std = jnp.exp(log_std)

    # reparameterized sample (dist.rsample): a = mean + std * eps
    a = mean + std * eps

    # Normal(mean, std).log_prob(a): (a - mean)/std == eps by construction
    log_prob = -0.5 * jnp.square(eps) - log_std - 0.5 * jnp.log(2.0 * jnp.pi)

    # tanh squash correction: 2*(log 2 - a - softplus(-2a))
    z = -2.0 * a
    softplus_z = jnp.maximum(z, 0.0) + jnp.log1p(jnp.exp(-jnp.abs(z)))
    corr = 2.0 * (jnp.log(2.0) - a - softplus_z)

    # single fused cross-lane reduction
    log_pi = jnp.sum(log_prob - corr, axis=1, keepdims=True)

    a_out = max_action * jnp.tanh(a)

    # pack [a | log_pi] into one lane-contiguous output tile -> single store
    out_ref[...] = jnp.concatenate([a_out, log_pi], axis=1)


def actor_forward(x, eps, params, max_action, *, block_batch=256):
    """x: [B, state_dim] f32, eps: [B, action_dim] f32 (standard normal).

    Returns (a, log_pi) with a: [B, action_dim], log_pi: [B, 1].
    """
    B, state_dim = x.shape
    hidden = params["w1"].shape[1]
    action_dim = params["wm"].shape[1]
    out_width = action_dim + 1

    # Fuse the two head layers into one wider matmul.
    wh = jnp.concatenate([params["wm"], params["wls"]], axis=1)   # [hidden, 2*A]
    bh = jnp.concatenate([params["bm"], params["bls"]], axis=1)   # [1, 2*A]

    # Batch tile: multiple of 8 sublanes, padded batch divisible by the tile
    # (guards the ragged last tile; padded rows are discarded in the wrapper).
    tb = min(block_batch, _round_up(B, 8))
    Bp = _round_up(B, tb)
    if Bp != B:
        x = jnp.pad(x, ((0, Bp - B), (0, 0)))
        eps = jnp.pad(eps, ((0, Bp - B), (0, 0)))

    grid = (Bp // tb,)

    kernel = functools.partial(
        _actor_kernel, max_action=float(max_action), action_dim=action_dim)

    flops = 2 * Bp * (state_dim * hidden + hidden * hidden + hidden * 2 * action_dim)
    transcendentals = Bp * action_dim * 4  # exp(log_std), exp/log1p, tanh
    bytes_accessed = 4 * (Bp * (state_dim + action_dim + out_width)
                          + state_dim * hidden + hidden * hidden
                          + hidden * 2 * action_dim + 2 * hidden + 2 * action_dim)

    out = pl.pallas_call(
        kernel,
        out_shape=jax.ShapeDtypeStruct((Bp, out_width), jnp.float32),
        grid_spec=pltpu.PrefetchScalarGridSpec(
            num_scalar_prefetch=0,
            grid=grid,
            in_specs=[
                pl.BlockSpec((tb, state_dim), lambda i: (i, 0)),      # x tile
                pl.BlockSpec((tb, action_dim), lambda i: (i, 0)),     # eps tile
                pl.BlockSpec((state_dim, hidden), lambda i: (0, 0)),  # w1 (resident)
                pl.BlockSpec((1, hidden), lambda i: (0, 0)),          # b1
                pl.BlockSpec((hidden, hidden), lambda i: (0, 0)),     # w2
                pl.BlockSpec((1, hidden), lambda i: (0, 0)),          # b2
                pl.BlockSpec((hidden, 2 * action_dim), lambda i: (0, 0)),  # heads W
                pl.BlockSpec((1, 2 * action_dim), lambda i: (0, 0)),       # heads b
            ],
            out_specs=pl.BlockSpec((tb, out_width), lambda i: (i, 0)),
        ),
        compiler_params=pltpu.CompilerParams(
            dimension_semantics=("parallel",),
        ),
        cost_estimate=pl.CostEstimate(
            flops=flops,
            transcendentals=transcendentals,
            bytes_accessed=bytes_accessed,
        ),
    )(x, eps, params["w1"], params["b1"], params["w2"], params["b2"], wh, bh)

    a = out[:B, :action_dim]
    log_pi = out[:B, action_dim:]
    return a, log_pi


def _init_linear(key, fan_in, fan_out):
    # Deterministic synthetic init (PyTorch-style uniform(-1/sqrt(fan_in), ..)).
    kw, kb = jax.random.split(key)
    bound = 1.0 / np.sqrt(fan_in)
    w = jax.random.uniform(kw, (fan_in, fan_out), jnp.float32, -bound, bound)
    b = jax.random.uniform(kb, (1, fan_out), jnp.float32, -bound, bound)
    return w, b


def _reference_forward(x, eps, p, max_action):
    h1 = jax.nn.relu(x @ p["w1"] + p["b1"])
    h2 = jax.nn.relu(h1 @ p["w2"] + p["b2"])
    mean = h2 @ p["wm"] + p["bm"]
    log_std = jnp.clip(h2 @ p["wls"] + p["bls"], -20.0, 2.0)
    std = jnp.exp(log_std)
    a = mean + std * eps
    log_prob = -0.5 * ((a - mean) / std) ** 2 - log_std - 0.5 * jnp.log(2.0 * jnp.pi)
    log_pi = jnp.sum(log_prob, axis=1, keepdims=True)
    corr = 2.0 * (jnp.log(2.0) - a - jax.nn.softplus(-2.0 * a))
    log_pi = log_pi - jnp.sum(corr, axis=1, keepdims=True)
    return max_action * jnp.tanh(a), log_pi


if __name__ == "__main__":
    batch = 8
    state_dim = 16
    hidden_width = 32
    action_dim = 4
    max_action = 2.0

    key = jax.random.PRNGKey(0)
    kx, keps, k1, k2, km, kls = jax.random.split(key, 6)

    x = jax.random.normal(kx, (batch, state_dim), jnp.float32)
    eps = jax.random.normal(keps, (batch, action_dim), jnp.float32)

    w1, b1 = _init_linear(k1, state_dim, hidden_width)
    w2, b2 = _init_linear(k2, hidden_width, hidden_width)
    wm, bm = _init_linear(km, hidden_width, action_dim)
    wls, bls = _init_linear(kls, hidden_width, action_dim)
    params = dict(w1=w1, b1=b1, w2=w2, b2=b2, wm=wm, bm=bm, wls=wls, bls=bls)

    a, log_pi = actor_forward(x, eps, params, max_action)
    a, log_pi = jax.block_until_ready((a, log_pi))

    a_ref, log_pi_ref = _reference_forward(x, eps, params, max_action)
    np.testing.assert_allclose(np.asarray(a), np.asarray(a_ref), rtol=1e-5, atol=1e-5)
    np.testing.assert_allclose(np.asarray(log_pi), np.asarray(log_pi_ref),
                               rtol=1e-5, atol=1e-5)

    print("KERNEL_OK")
</pallas_src>

<mosaic_0001>
module attributes {stable_mosaic.version = 11 : i64} {
  func.func @_actor_kernel(%arg0: i32, %arg1: memref<8x16xf32, #tpu.memory_space<vmem>>, %arg2: memref<8x4xf32, #tpu.memory_space<vmem>>, %arg3: memref<16x32xf32, #tpu.memory_space<vmem>>, %arg4: memref<1x32xf32, #tpu.memory_space<vmem>>, %arg5: memref<32x32xf32, #tpu.memory_space<vmem>>, %arg6: memref<1x32xf32, #tpu.memory_space<vmem>>, %arg7: memref<32x8xf32, #tpu.memory_space<vmem>>, %arg8: memref<1x8xf32, #tpu.memory_space<vmem>>, %arg9: memref<8x5xf32, #tpu.memory_space<vmem>>) attributes {dimension_semantics = [#tpu.dimension_semantics<parallel>], iteration_bounds = array<i64: 1>, scalar_prefetch = 0 : i64, scratch_operands = 0 : i64, tpu.core_type = #tpu.core_type<tc>, window_params = [{transform_indices = @transform_0, window_bounds = array<i64: 8, 16>}, {transform_indices = @transform_1, window_bounds = array<i64: 8, 4>}, {pipeline_mode = #tpu.pipeline_mode<synchronous>, transform_indices = @transform_2, window_bounds = array<i64: 16, 32>}, {pipeline_mode = #tpu.pipeline_mode<synchronous>, transform_indices = @transform_3, window_bounds = array<i64: 1, 32>}, {pipeline_mode = #tpu.pipeline_mode<synchronous>, transform_indices = @transform_4, window_bounds = array<i64: 32, 32>}, {pipeline_mode = #tpu.pipeline_mode<synchronous>, transform_indices = @transform_5, window_bounds = array<i64: 1, 32>}, {pipeline_mode = #tpu.pipeline_mode<synchronous>, transform_indices = @transform_6, window_bounds = array<i64: 32, 8>}, {pipeline_mode = #tpu.pipeline_mode<synchronous>, transform_indices = @transform_7, window_bounds = array<i64: 1, 8>}, {transform_indices = @transform_8, window_bounds = array<i64: 8, 5>}]} {
    %c0 = arith.constant 0 : index
    %c0_0 = arith.constant 0 : index
    %0 = vector.load %arg1[%c0, %c0_0] : memref<8x16xf32, #tpu.memory_space<vmem>>, vector<8x16xf32>
    %c0_1 = arith.constant 0 : index
    %c0_2 = arith.constant 0 : index
    %1 = vector.load %arg2[%c0_1, %c0_2] : memref<8x4xf32, #tpu.memory_space<vmem>>, vector<8x4xf32>
    %c0_3 = arith.constant 0 : index
    %c0_4 = arith.constant 0 : index
    %2 = vector.load %arg3[%c0_3, %c0_4] : memref<16x32xf32, #tpu.memory_space<vmem>>, vector<16x32xf32>
    %cst = arith.constant dense<0.000000e+00> : vector<8x32xf32>
    %3 = tpu.matmul %0, %2, %cst {dimension_numbers = #tpu.dot_dimension_numbers<[1], [0], [0], [1], [0, 0, 1, 1], [], []>} : vector<8x16xf32>, vector<16x32xf32>, vector<8x32xf32> -> vector<8x32xf32>
    %c0_5 = arith.constant 0 : index
    %c0_6 = arith.constant 0 : index
    %4 = vector.load %arg4[%c0_5, %c0_6] : memref<1x32xf32, #tpu.memory_space<vmem>>, vector<1x32xf32>
    %5 = vector.broadcast %4 : vector<1x32xf32> to vector<8x32xf32>
    %6 = arith.addf %3, %5 : vector<8x32xf32>
    %cst_7 = arith.constant 0.000000e+00 : f32
    %7 = vector.broadcast %cst_7 : f32 to vector<8x32xf32>
    %8 = arith.maximumf %6, %7 : vector<8x32xf32>
    %c0_8 = arith.constant 0 : index
    %c0_9 = arith.constant 0 : index
    %9 = vector.load %arg5[%c0_8, %c0_9] : memref<32x32xf32, #tpu.memory_space<vmem>>, vector<32x32xf32>
    %cst_10 = arith.constant dense<0.000000e+00> : vector<8x32xf32>
    %10 = tpu.matmul %8, %9, %cst_10 {dimension_numbers = #tpu.dot_dimension_numbers<[1], [0], [0], [1], [0, 0, 1, 1], [], []>} : vector<8x32xf32>, vector<32x32xf32>, vector<8x32xf32> -> vector<8x32xf32>
    %c0_11 = arith.constant 0 : index
    %c0_12 = arith.constant 0 : index
    %11 = vector.load %arg6[%c0_11, %c0_12] : memref<1x32xf32, #tpu.memory_space<vmem>>, vector<1x32xf32>
    %12 = vector.broadcast %11 : vector<1x32xf32> to vector<8x32xf32>
    %13 = arith.addf %10, %12 : vector<8x32xf32>
    %cst_13 = arith.constant 0.000000e+00 : f32
    %14 = vector.broadcast %cst_13 : f32 to vector<8x32xf32>
    %15 = arith.maximumf %13, %14 : vector<8x32xf32>
    %c0_14 = arith.constant 0 : index
    %c0_15 = arith.constant 0 : index
    %16 = vector.load %arg7[%c0_14, %c0_15] : memref<32x8xf32, #tpu.memory_space<vmem>>, vector<32x8xf32>
    %cst_16 = arith.constant dense<0.000000e+00> : vector<8x8xf32>
    %17 = tpu.matmul %15, %16, %cst_16 {dimension_numbers = #tpu.dot_dimension_numbers<[1], [0], [0], [1], [0, 0, 1, 1], [], []>} : vector<8x32xf32>, vector<32x8xf32>, vector<8x8xf32> -> vector<8x8xf32>
    %c0_17 = arith.constant 0 : index
    %c0_18 = arith.constant 0 : index
    %18 = vector.load %arg8[%c0_17, %c0_18] : memref<1x8xf32, #tpu.memory_space<vmem>>, vector<1x8xf32>
    %19 = vector.broadcast %18 : vector<1x8xf32> to vector<8x8xf32>
    %20 = arith.addf %17, %19 : vector<8x8xf32>
    %21 = vector.extract_strided_slice %20 {offsets = [0, 0], sizes = [8, 4], strides = [1, 1]} : vector<8x8xf32> to vector<8x4xf32>
    %22 = vector.extract_strided_slice %20 {offsets = [0, 4], sizes = [8, 4], strides = [1, 1]} : vector<8x8xf32> to vector<8x4xf32>
    %cst_19 = arith.constant -2.000000e+01 : f32
    %cst_20 = arith.constant 2.000000e+00 : f32
    %23 = vector.broadcast %cst_19 : f32 to vector<8x4xf32>
    %24 = arith.maximumf %23, %22 : vector<8x4xf32>
    %25 = vector.broadcast %cst_20 : f32 to vector<8x4xf32>
    %26 = arith.minimumf %25, %24 : vector<8x4xf32>
    %27 = math.exp %26 : vector<8x4xf32>
    %28 = arith.mulf %27, %1 : vector<8x4xf32>
    %29 = arith.addf %21, %28 : vector<8x4xf32>
    %30 = arith.mulf %1, %1 : vector<8x4xf32>
    %cst_21 = arith.constant -5.000000e-01 : f32
    %31 = vector.broadcast %cst_21 : f32 to vector<8x4xf32>
    %32 = arith.mulf %31, %30 : vector<8x4xf32>
    %33 = arith.subf %32, %26 : vector<8x4xf32>
    %cst_22 = arith.constant 6.28318548 : f32
    %34 = math.log %cst_22 : f32
    %cst_23 = arith.constant 5.000000e-01 : f32
    %35 = arith.mulf %cst_23, %34 : f32
    %36 = vector.broadcast %35 : f32 to vector<8x4xf32>
    %37 = arith.subf %33, %36 : vector<8x4xf32>
    %cst_24 = arith.constant -2.000000e+00 : f32
    %38 = vector.broadcast %cst_24 : f32 to vector<8x4xf32>
    %39 = arith.mulf %38, %29 : vector<8x4xf32>
    %cst_25 = arith.constant 0.000000e+00 : f32
    %40 = vector.broadcast %cst_25 : f32 to vector<8x4xf32>
    %41 = arith.maximumf %39, %40 : vector<8x4xf32>
    %42 = math.absf %39 : vector<8x4xf32>
    %cst_26 = arith.constant 0.000000e+00 : f32
    %43 = vector.broadcast %cst_26 : f32 to vector<8x4xf32>
    %44 = arith.subf %43, %42 : vector<8x4xf32>
    %45 = math.exp %44 : vector<8x4xf32>
    %46 = math.log1p %45 : vector<8x4xf32>
    %47 = arith.addf %41, %46 : vector<8x4xf32>
    %cst_27 = arith.constant 2.000000e+00 : f32
    %48 = math.log %cst_27 : f32
    %49 = vector.broadcast %48 : f32 to vector<8x4xf32>
    %50 = arith.subf %49, %29 : vector<8x4xf32>
    %51 = arith.subf %50, %47 : vector<8x4xf32>
    %cst_28 = arith.constant 2.000000e+00 : f32
    %52 = vector.broadcast %cst_28 : f32 to vector<8x4xf32>
    %53 = arith.mulf %52, %51 : vector<8x4xf32>
    %54 = arith.subf %37, %53 : vector<8x4xf32>
    %cst_29 = arith.constant dense<0.000000e+00> : vector<8xf32>
    %55 = vector.multi_reduction <add>, %54, %cst_29 [1] : vector<8x4xf32> to vector<8xf32>
    %56 = vector.shape_cast %55 : vector<8xf32> to vector<8x1xf32>
    %57 = math.tanh %29 : vector<8x4xf32>
    %cst_30 = arith.constant 2.000000e+00 : f32
    %58 = vector.broadcast %cst_30 : f32 to vector<8x4xf32>
    %59 = arith.mulf %58, %57 : vector<8x4xf32>
    %60 = tpu.concatenate %59, %56 in 1 : vector<8x4xf32>, vector<8x1xf32> -> vector<8x5xf32>
    %c0_31 = arith.constant 0 : index
    %c0_32 = arith.constant 0 : index
    %61 = vector.load %arg9[%c0_31, %c0_32] : memref<8x5xf32, #tpu.memory_space<vmem>>, vector<8x5xf32>
    tpu.vector_store %arg9[%c0_31, %c0_32], %60 {strides = array<i32>} : memref<8x5xf32, #tpu.memory_space<vmem>>, vector<8x5xf32>,
    return
  }
  func.func @transform_0(%arg0: i32) -> (i32, i32) {
    %c0_i32 = arith.constant 0 : i32
    %c0_i32_0 = arith.constant 0 : i32
    return %arg0, %c0_i32 : i32, i32
  }
  func.func @transform_1(%arg0: i32) -> (i32, i32) {
    %c0_i32 = arith.constant 0 : i32
    %c0_i32_0 = arith.constant 0 : i32
    return %arg0, %c0_i32 : i32, i32
  }
  func.func @transform_2(%arg0: i32) -> (i32, i32) {
    %c0_i32 = arith.constant 0 : i32
    %c0_i32_0 = arith.constant 0 : i32
    %c0_i32_1 = arith.constant 0 : i32
    return %c0_i32, %c0_i32_0 : i32, i32
  }
  func.func @transform_3(%arg0: i32) -> (i32, i32) {
    %c0_i32 = arith.constant 0 : i32
    %c0_i32_0 = arith.constant 0 : i32
    %c0_i32_1 = arith.constant 0 : i32
    return %c0_i32, %c0_i32_0 : i32, i32
  }
  func.func @transform_4(%arg0: i32) -> (i32, i32) {
    %c0_i32 = arith.constant 0 : i32
    %c0_i32_0 = arith.constant 0 : i32
    %c0_i32_1 = arith.constant 0 : i32
    return %c0_i32, %c0_i32_0 : i32, i32
  }
  func.func @transform_5(%arg0: i32) -> (i32, i32) {
    %c0_i32 = arith.constant 0 : i32
    %c0_i32_0 = arith.constant 0 : i32
    %c0_i32_1 = arith.constant 0 : i32
    return %c0_i32, %c0_i32_0 : i32, i32
  }
  func.func @transform_6(%arg0: i32) -> (i32, i32) {
    %c0_i32 = arith.constant 0 : i32
    %c0_i32_0 = arith.constant 0 : i32
    %c0_i32_1 = arith.constant 0 : i32
    return %c0_i32, %c0_i32_0 : i32, i32
  }
  func.func @transform_7(%arg0: i32) -> (i32, i32) {
    %c0_i32 = arith.constant 0 : i32
    %c0_i32_0 = arith.constant 0 : i32
    %c0_i32_1 = arith.constant 0 : i32
    return %c0_i32, %c0_i32_0 : i32, i32
  }
  func.func @transform_8(%arg0: i32) -> (i32, i32) {
    %c0_i32 = arith.constant 0 : i32
    %c0_i32_0 = arith.constant 0 : i32
    return %arg0, %c0_i32 : i32, i32
  }
}

</mosaic_0001>

<llo_original>
// kernel: tpu_custom_call.1
$region0: #{tpu_custom_call.1}
  #allocation0 [shape = 'u32[]', space=smem, size = 0x4, offset = 0x4, fixed_abs, tag = 'smem constant byte address 0x4 - core index']
  #allocation1 [shape = 'u32[72,128]{1,0:T(1,128)}', space=vmem, size = 0x9000, scoped, tag = 'internal scratch']
  %s0 = inlined_call_operand.hbm [shape: f32[8,16], index: 0, kind: input, shape index: {}]
  %s1 = inlined_call_operand.vmem [shape: f32[8,4], index: 1, kind: input, shape index: {}]
  %s2 = inlined_call_operand.vmem [shape: f32[16,32], index: 2, kind: input, shape index: {}]
  %s3 = inlined_call_operand.hbm [shape: f32[1,32], index: 3, kind: input, shape index: {}]
  %s4 = inlined_call_operand.vmem [shape: f32[32,32], index: 4, kind: input, shape index: {}]
  %s5 = inlined_call_operand.hbm [shape: f32[1,32], index: 5, kind: input, shape index: {}]
  %s6 = inlined_call_operand.vmem [shape: f32[32,8], index: 6, kind: input, shape index: {}]
  %s7 = inlined_call_operand.vmem [shape: f32[1,8], index: 7, kind: input, shape index: {}]
  %s8 = inlined_call_operand.hbm [shape: f32[8,5], index: 8, kind: output, shape index: {}]
  %s9 = sld [smem:[#allocation0]]
  $region54: #{tpu_custom_call.1} parent=0
    _
  %s11 = ssub.s32 1, %s9
  %s12 = scalar_select 0, %s11, %s9
  $region1: #{tpu_custom_call.1} parent=0
    #allocation2 [shape = 'u8[4096]{0}', space=vmem, size = 0x1000, scoped, tag = 'input window, operand 0, single buffered']
    #allocation3 [shape = 's32[1]{0}', space=sflag, size = 0x4, scoped, tag = 'scoped memory for tpu_custom_call.1']
    #allocation4 [shape = 's32[1]{0}', space=sflag, size = 0x4, scoped, tag = 'scoped memory for tpu_custom_call.1']
    #allocation5 [shape = 'u8[512]{0}', space=vmem, size = 0x400, scoped, tag = 'input window, operand 3, single buffered']
    #allocation6 [shape = 's32[1]{0}', space=sflag, size = 0x4, scoped, tag = 'scoped memory for tpu_custom_call.1']
    #allocation7 [shape = 'u8[512]{0}', space=vmem, size = 0x400, scoped, tag = 'input window, operand 5, single buffered']
    #allocation8 [shape = 'u8[4096]{0}', space=vmem, size = 0x1000, scoped, tag = 'output window, operand 0, single buffered']
    %13 = vsyncpa [#allocation3], 0
    %14 = vsyncpa [#allocation6], 0
    %15 = vsyncpa [#allocation4], 0
    // Predicated region
    $region2: #{tpu_custom_call.1} parent=1 // pred_check
      _
    $region3: #{tpu_custom_call.1} parent=1 // pred_check_branch
      %17 = sbr.rel (0) target = $region5
    $region4: #{tpu_custom_call.1} parent=1 // pred_region
      %19 = vsyncadd [#allocation3], 0
      %s21 = sshll.u32 %s0, 4
      %s22 = int_to_ptr.hbm [resolvable:$true] %s21
      %s23 = sshll.u32 [#allocation2], 4
      %s24 = int_to_ptr.vmem [resolvable:$true] %s23
      %26 = dma.hbm_to_vmem [thread:$0]  %s22, 128, %s24, [#allocation3]
    $region5: #{tpu_custom_call.1} parent=1 // pred_fallthru
      _
    // Predicated region
    $region6: #{tpu_custom_call.1} parent=1 // pred_check
      _
    $region7: #{tpu_custom_call.1} parent=1 // pred_check_branch
      %28 = sbr.rel (0) target = $region9
    $region8: #{tpu_custom_call.1} parent=1 // pred_region
      _
    $region9: #{tpu_custom_call.1} parent=1 // pred_fallthru
      _
    // Predicated region
    $region10: #{tpu_custom_call.1} parent=1 // pred_check
      _
    $region11: #{tpu_custom_call.1} parent=1 // pred_check_branch
      %30 = sbr.rel (0) target = $region13
    $region12: #{tpu_custom_call.1} parent=1 // pred_region
      _
    $region13: #{tpu_custom_call.1} parent=1 // pred_fallthru
      _
    // Predicated region
    $region14: #{tpu_custom_call.1} parent=1 // pred_check
      _
    $region15: #{tpu_custom_call.1} parent=1 // pred_check_branch
      %32 = sbr.rel (0) target = $region17
    $region16: #{tpu_custom_call.1} parent=1 // pred_region
      %34 = vsyncadd [#allocation6], 0
      %s36 = sshll.u32 %s3, 4
      %s37 = int_to_ptr.hbm [resolvable:$true] %s36
      %s38 = sshll.u32 [#allocation5], 4
      %s39 = int_to_ptr.vmem [resolvable:$true] %s38
      %41 = dma.hbm_to_vmem [thread:$0]  %s37, 16, %s39, [#allocation6]
    $region17: #{tpu_custom_call.1} parent=1 // pred_fallthru
      _
    // Predicated region
    $region18: #{tpu_custom_call.1} parent=1 // pred_check
      _
    $region19: #{tpu_custom_call.1} parent=1 // pred_check_branch
      %43 = sbr.rel (0) target = $region21
    $region20: #{tpu_custom_call.1} parent=1 // pred_region
      _
    $region21: #{tpu_custom_call.1} parent=1 // pred_fallthru
      _
    // Predicated region
    $region22: #{tpu_custom_call.1} parent=1 // pred_check
      _
    $region23: #{tpu_custom_call.1} parent=1 // pred_check_branch
      %45 = sbr.rel (0) target = $region25
    $region24: #{tpu_custom_call.1} parent=1 // pred_region
      %47 = vsyncadd [#allocation6], 0
      %s49 = sshll.u32 %s5, 4
      %s50 = int_to_ptr.hbm [resolvable:$true] %s49
      %s51 = sshll.u32 [#allocation7], 4
      %s52 = int_to_ptr.vmem [resolvable:$true] %s51
      %54 = dma.hbm_to_vmem [thread:$0]  %s50, 16, %s52, [#allocation6]
    $region25: #{tpu_custom_call.1} parent=1 // pred_fallthru
      _
    // Predicated region
    $region26: #{tpu_custom_call.1} parent=1 // pred_check
      _
    $region27: #{tpu_custom_call.1} parent=1 // pred_check_branch
      %56 = sbr.rel (0) target = $region29
    $region28: #{tpu_custom_call.1} parent=1 // pred_region
      _
    $region29: #{tpu_custom_call.1} parent=1 // pred_fallthru
      _
    // Predicated region
    $region30: #{tpu_custom_call.1} parent=1 // pred_check
      _
    $region31: #{tpu_custom_call.1} parent=1 // pred_check_branch
      %58 = sbr.rel (0) target = $region33
    $region32: #{tpu_custom_call.1} parent=1 // pred_region
      _
    $region33: #{tpu_custom_call.1} parent=1 // pred_fallthru
      _
    // Predicated region
    $region34: #{tpu_custom_call.1} parent=1 // pred_check
      _
    $region35: #{tpu_custom_call.1} parent=1 // pred_check_branch
      %60 = sbr.rel (0) target = $region37
    $region36: #{tpu_custom_call.1} parent=1 // pred_region
      %62 = dma.done [#allocation3], 128
    $region37: #{tpu_custom_call.1} parent=1 // pred_fallthru
      _
    // Predicated region
    $region38: #{tpu_custom_call.1} parent=1 // pred_check
      _
    $region39: #{tpu_custom_call.1} parent=1 // pred_check_branch
      %64 = sbr.rel (0) target = $region41
    $region40: #{tpu_custom_call.1} parent=1 // pred_region
      %66 = dma.done [#allocation6], 16
    $region41: #{tpu_custom_call.1} parent=1 // pred_fallthru
      _
    // Predicated region
    $region42: #{tpu_custom_call.1} parent=1 // pred_check
      _
    $region43: #{tpu_custom_call.1} parent=1 // pred_check_branch
      %68 = sbr.rel (0) target = $region45
    $region44: #{tpu_custom_call.1} parent=1 // pred_region
      %70 = dma.done [#allocation6], 16
    $region45: #{tpu_custom_call.1} parent=1 // pred_fallthru
      _
    %v71 = vld [vmem:[#allocation2] sm:$0xff]
    %v72 = vld [vmem:[%s1] sm:$0xff]
    %v73 = vld [vmem:[%s2] sm:$0xff]
    %v74 = vld [vmem:[%s2 + $0x8] sm:$0xff]
    %v75 = vld [vmem:[#allocation5] sm:$0x1]
    %v77 = vperm.slane %v75, 0
    %vm79 = vcmask 130048
    %v81 = vsel %vm79, %v71, 0
    %83 = vmatpush.msra.mxu0 0.0
    %84 = vmatpush.msra.mxu0 0.0
    %85 = vmatpush.msra.mxu0 0.0
    %86 = vmatpush.msra.mxu0 0.0
    %87 = vmatpush.msra.mxu0 0.0
    %88 = vmatpush.msra.mxu0 0.0
    %89 = vmatpush.msra.mxu0 0.0
    %90 = vmatpush.msra.mxu0 0.0
    %91 = vmatpush.msra.mxu0 0.0
    %92 = vmatpush.msra.mxu0 0.0
    %93 = vmatpush.msra.mxu0 0.0
    %94 = vmatpush.msra.mxu0 0.0
    %95 = vmatpush.msra.mxu0 0.0
    %96 = vmatpush.msra.mxu0 0.0
    %97 = vmatpush.msra.mxu0 %v74
    %98 = vmatpush.msra.mxu0 %v73
    %99 = vmatmul.f32.gmra.mxu0 %v81
    %v100 = vpop.f32.mrf.mxu0
    %v101 = vadd.f32 %v77, %v100
    %102 = vdwg.mxu0
    %v103 = vmax.f32 %v101, 0.0
    %v104 = vld [vmem:[%s4] sm:$0xff]
    %v105 = vld [vmem:[%s4 + $0x8] sm:$0xff]
    %v106 = vld [vmem:[%s4 + $0x10] sm:$0xff]
    %v107 = vld [vmem:[%s4 + $0x18] sm:$0xff]
    %v108 = vld [vmem:[#allocation7] sm:$0x1]
    %v110 = vperm.slane %v108, 0
    %vm112 = vcmask 261120
    %v114 = vsel %vm112, %v103, 0
    %116 = vmatpush.msra.mxu0 0.0
    %117 = vmatpush.msra.mxu0 0.0
    %118 = vmatpush.msra.mxu0 0.0
    %119 = vmatpush.msra.mxu0 0.0
    %120 = vmatpush.msra.mxu0 0.0
    %121 = vmatpush.msra.mxu0 0.0
    %122 = vmatpush.msra.mxu0 0.0
    %123 = vmatpush.msra.mxu0 0.0
    %124 = vmatpush.msra.mxu0 0.0
    %125 = vmatpush.msra.mxu0 0.0
    %126 = vmatpush.msra.mxu0 0.0
    %127 = vmatpush.msra.mxu0 0.0
    %128 = vmatpush.msra.mxu0 %v107
    %129 = vmatpush.msra.mxu0 %v106
    %130 = vmatpush.msra.mxu0 %v105
    %131 = vmatpush.msra.mxu0 %v104
    %132 = vmatmul.f32.gmra.mxu0 %v114
    %v133 = vpop.f32.mrf.mxu0
    %v134 = vadd.f32 %v110, %v133
    %135 = vdwg.mxu0
    %v136 = vmax.f32 %v134, 0.0
    %v137 = vld [vmem:[%s6] sm:$0xff]
    %v138 = vld [vmem:[%s6 + $0x8] sm:$0xff]
    %v139 = vld [vmem:[%s6 + $0x10] sm:$0xff]
    %v140 = vld [vmem:[%s6 + $0x18] sm:$0xff]
    %v141 = vld [vmem:[%s7] sm:$0x1]
    %v143 = vperm.slane %v141, 0
    %v146 = vsel %vm112, %v136, 0
    %148 = vmatpush.msra.mxu0 0.0
    %149 = vmatpush.msra.mxu0 0.0
    %150 = vmatpush.msra.mxu0 0.0
    %151 = vmatpush.msra.mxu0 0.0
    %152 = vmatpush.msra.mxu0 0.0
    %153 = vmatpush.msra.mxu0 0.0
    %154 = vmatpush.msra.mxu0 0.0
    %155 = vmatpush.msra.mxu0 0.0
    %156 = vmatpush.msra.mxu0 0.0
    %157 = vmatpush.msra.mxu0 0.0
    %158 = vmatpush.msra.mxu0 0.0
    %159 = vmatpush.msra.mxu0 0.0
    %160 = vmatpush.msra.mxu0 %v140
    %161 = vmatpush.msra.mxu0 %v139
    %162 = vmatpush.msra.mxu0 %v138
    %163 = vmatpush.msra.mxu0 %v137
    %164 = vmatmul.f32.gmra.mxu0 %v146
    %v165 = vpop.f32.mrf.mxu0
    %v166 = vadd.f32 %v143, %v165
    %167 = vdwg.mxu0
    %v168 = vmax.f32 %v166, -20.0
    %v169 = vmin.f32 %v168, 2.0
    %v170 = vmul.f32 %v169, 1.442695
    %v171 = vpow.pop %v170
    %173 = vrot.lane.b32.xlu0 %v72, 4
    %v174 = vpop.permute.xlu0 %173
    %v176 = vmul.f32 %v171, %v174
    %178 = vrot.lane.b32.xlu0 %v176, 124
    %v179 = vpop.permute.xlu0 %178
    %v181 = vadd.f32 %v166, %v179
    %v182 = vmul.f32 %v72, %v72
    %v183 = vmul.f32 %v182, -0.5
    %185 = vrot.lane.b32.xlu0 %v169, 124
    %v186 = vpop.permute.xlu0 %185
    %v188 = vsub.f32 %v183, %v186
    %v189 = vsub.f32 %v188, 0.9189385
    %v190 = vmul.f32 %v181, -2.0
    %v191 = vmax.f32 %v190, 0.0
    %v192 = vand.u32 2147483647, %v190
    %v193 = vsub.f32 0.0, %v192
    %v194 = vmul.f32 %v193, 1.442695
    %v195 = vpow.pop %v194
    %v196 = vadd.f32 %v195, 1.0
    %v197 = vlog2.pop %v196
    %v198 = vmul.f32 %v197, 0.6931472
    %v199 = vmul.f32 -0.5, %v195
    %v200 = vadd.f32 %v199, 1.0
    %v201 = vmul.f32 %v200, %v195
    %v202 = vand.u32 2147483647, %v195
    %vm203 = vcmp.lt.f32.partialorder %v202, 0.0004427343
    %v204 = vsel %vm203, %v201, %v198
    %v205 = vadd.f32 %v191, %v204
    %v206 = vsub.f32 0.6931472, %v181
    %v207 = vsub.f32 %v206, %v205
    %v208 = vmul.f32 %v207, 2.0
    %v209 = vsub.f32 %v189, %v208
    %vm210 = vcmask 31744
    %v211 = vsel %vm210, %v209, 0.0
    %212 = vadd.xlane.f32.xlu0 %v211
    %v213 = vpop.xlane.xlu0 %212
    %v214 = vtanh.pop %v181
    %v215 = vmul.f32 %v214, 2.0
    %v216 = vsel %vm210, %v215, %v213
    %vm217 = vcmask 39936
    %218 = vst.msk [vmem:[#allocation8] sm:$0xff] %vm217, %v216
    // Predicated region
    $region46: #{tpu_custom_call.1} parent=1 // pred_check
      _
    $region47: #{tpu_custom_call.1} parent=1 // pred_check_branch
      %220 = sbr.rel (0) target = $region49
    $region48: #{tpu_custom_call.1} parent=1 // pred_region
      %222 = vsyncadd [#allocation4], 0
      %s224 = sshll.u32 [#allocation8], 4
      %s225 = int_to_ptr.vmem [resolvable:$true] %s224
      %s226 = sshll.u32 %s8, 4
      %s227 = int_to_ptr.hbm [resolvable:$true] %s226
      %229 = dma.vmem_to_hbm [thread:$0]  %s225, 128, %s227, [#allocation4]
    $region49: #{tpu_custom_call.1} parent=1 // pred_fallthru
      _
    // Predicated region
    $region50: #{tpu_custom_call.1} parent=1 // pred_check
      _
    $region51: #{tpu_custom_call.1} parent=1 // pred_check_branch
      %231 = sbr.rel (0) target = $region53
    $region52: #{tpu_custom_call.1} parent=1 // pred_region
      %233 = dma.done [#allocation4], 128
    $region53: #{tpu_custom_call.1} parent=1 // pred_fallthru
      _
    %234 = vsyncpa [#allocation3], 1
    %235 = vsyncpa [#allocation6], 1
    %236 = vsyncpa [#allocation4], 1

</llo_original>
